<compile_context>
chip_gen: v5e
topology: v5e:2x2
jax: 0.10.0
libtpu: 0.0.40
codegen_flags: <defaults>
</compile_context>

<pallas_src>
import functools

import jax
import jax.numpy as jnp
from jax.experimental import pallas as pl
from jax.experimental.pallas import tpu as pltpu

LANE = 128
SUBLANE = 8


def _round_up(n, m):
    return (n + m - 1) // m * m


# ----------------------------------------------------------------------------
# Pallas kernel: K-reduced layer1 + fused layer2 + merged (sigmoid | softmax).
# ----------------------------------------------------------------------------
def _disc_ac_kernel(x_ref, w1_ref, b1_ref, w2_ref, b2_ref, wh_ref, bh_ref,
                    out_ref, acc_ref, *, out_dim, n_classes):
    k = pl.program_id(1)

    @pl.when(k == 0)
    def _():
        acc_ref[...] = jnp.zeros_like(acc_ref)

    # layer1 partial product for this K tile: (TM, TK) bf16 @ (TK, H1p) bf16
    acc_ref[...] += jnp.dot(x_ref[...], w1_ref[...],
                            preferred_element_type=jnp.float32)

    @pl.when(k == pl.num_programs(1) - 1)
    def _():
        # layer1 bias + ReLU
        h1 = jnp.maximum(acc_ref[...] + b1_ref[...], 0.0)

        # layer2
        h2 = jnp.dot(h1.astype(jnp.bfloat16), w2_ref[...],
                     preferred_element_type=jnp.float32) + b2_ref[...]
        h2 = jnp.maximum(h2, 0.0)

        # fused heads: single lane-dense (TM, HOp) matmul
        logits = jnp.dot(h2.astype(jnp.bfloat16), wh_ref[...],
                         preferred_element_type=jnp.float32) + bh_ref[...]

        col = jax.lax.broadcasted_iota(jnp.int32, logits.shape, 1)
        is_out = col < out_dim

        # sigmoid head (native logistic: one EUP op, no exp(-x) overflow path)
        sig = jax.nn.sigmoid(logits)

        if n_classes > 0:
            # softmax over the class lanes only (padded lanes masked to -inf)
            is_cls = (col >= out_dim) & (col < out_dim + n_classes)
            cls_logits = jnp.where(is_cls, logits, -jnp.inf)
            m = jnp.max(cls_logits, axis=1, keepdims=True)
            e = jnp.where(is_cls, jnp.exp(cls_logits - m), 0.0)
            denom = jnp.sum(e, axis=1, keepdims=True)
            rest = e * pl.reciprocal(denom, approx=True)   # 0 outside class lanes
        else:
            rest = jnp.zeros_like(logits)

        # single select: sigmoid on out lanes, softmax on class lanes, 0 on pad
        out_ref[...] = jnp.where(is_out, sig, rest).astype(out_ref.dtype)


# ----------------------------------------------------------------------------
# Wrapper: 2-D grid pallas_call with generation-aware VMEM / tile sizing.
# ----------------------------------------------------------------------------
def discriminator_ac_forward(x, params, *, tile_m=512, tile_k=None):
    """x: (B, n_features) float32. Returns (out[B, out_dim], cls[B, n_classes])."""
    B, F = x.shape
    out_dim = params["out_dim"]
    n_classes = params["n_classes"]
    Kp, H1p = params["w1"].shape
    H2p = params["w2"].shape[1]
    HOp = params["wh"].shape[1]

    # --- generation-aware per-core VMEM budget (v5e/v6e 128 MiB, v7x 64 MiB) -
    try:
        vmem_cap = int(pltpu.get_tpu_info().vmem_capacity_bytes)
    except Exception:  # pragma: no cover - fallback if query unavailable
        vmem_cap = 64 * 1024 * 1024
    budget = int(0.8 * vmem_cap)

    def footprint(tm, tk):
        # per-TensorCore footprint ("parallel" batch axis duplicates the
        # resident weights into each core's own VMEM, so per-core is correct)
        x_bytes = 2 * tm * tk * 2                              # x tile, 2 bufs, bf16
        w1_bytes = 2 * tk * H1p * 2                            # W1 K-slab, 2 bufs
        wrest = (H1p * H2p + H2p * HOp) * 2 + (H1p + H2p + HOp) * 4  # Buffered(1)
        out_bytes = 2 * tm * HOp * 4                           # out tile, 2 bufs
        acc_bytes = tm * H1p * 4                               # f32 accumulator
        live = 2 * tm * (H1p + H2p + HOp) * 4                  # compute headroom
        return x_bytes + w1_bytes + wrest + out_bytes + acc_bytes + live

    # --- batch tile: minimize last-tile padding (<= 7 dead rows) -------------
    n_tiles = pl.cdiv(B, tile_m)
    TM = _round_up(pl.cdiv(B, n_tiles), SUBLANE)

    def pick_tk(tm):
        cands = ([Kp] if Kp <= 2048 else []) + [2048, 1024, 512, 256, 128]
        for c in cands:
            if c <= Kp and Kp % c == 0 and footprint(tm, c) <= budget:
                return c
        return None

    if tile_k is not None:
        assert Kp % tile_k == 0, "tile_k must divide the padded feature dim"
        TK = tile_k
    else:
        TK = pick_tk(TM)
        while TK is None and TM > SUBLANE:
            TM = _round_up(max(TM // 2, SUBLANE), SUBLANE)
            TK = pick_tk(TM)
        if TK is None:
            TK = 128  # Kp is always a multiple of 128

    n_tiles = pl.cdiv(B, TM)
    Bp = n_tiles * TM
    n_k = Kp // TK

    # Pad rows to Bp / features to Kp and downcast once in the wrapper:
    # halves x HBM traffic and keeps every block full.
    xp = jnp.zeros((Bp, Kp), jnp.bfloat16).at[:B, :F].set(x.astype(jnp.bfloat16))

    flops = 2 * Bp * (Kp * H1p + H1p * H2p + H2p * HOp)
    transcendentals = 2 * Bp * HOp
    bytes_accessed = (Bp * Kp * 2
                      + (Kp * H1p + H1p * H2p + H2p * HOp) * 2
                      + (H1p + H2p + HOp) * 4
                      + Bp * HOp * 4)

    invariant = pl.Buffered(1)   # single-buffer the grid-invariant weights
    in_specs = [
        pl.BlockSpec((TM, TK), lambda i, k: (i, k)),            # x: batch/K tiled
        pl.BlockSpec((TK, H1p), lambda i, k: (k, 0)),           # W1 K-slab
        pl.BlockSpec((1, H1p), lambda i, k: (0, 0), pipeline_mode=invariant),
        pl.BlockSpec((H1p, H2p), lambda i, k: (0, 0), pipeline_mode=invariant),
        pl.BlockSpec((1, H2p), lambda i, k: (0, 0), pipeline_mode=invariant),
        pl.BlockSpec((H2p, HOp), lambda i, k: (0, 0), pipeline_mode=invariant),
        pl.BlockSpec((1, HOp), lambda i, k: (0, 0), pipeline_mode=invariant),
    ]

    kernel = pl.pallas_call(
        functools.partial(_disc_ac_kernel, out_dim=out_dim, n_classes=n_classes),
        grid=(n_tiles, n_k),
        in_specs=in_specs,
        out_specs=pl.BlockSpec((TM, HOp), lambda i, k: (i, 0)),
        out_shape=jax.ShapeDtypeStruct((Bp, HOp), jnp.float32),
        scratch_shapes=[pltpu.VMEM((TM, H1p), jnp.float32)],
        compiler_params=pltpu.CompilerParams(
            dimension_semantics=("parallel", "arbitrary"),
            vmem_limit_bytes=budget),
        cost_estimate=pl.CostEstimate(
            flops=flops,
            transcendentals=transcendentals,
            bytes_accessed=bytes_accessed),
    )
    slab = kernel(xp, params["w1"], params["b1"], params["w2"], params["b2"],
                  params["wh"], params["bh"])
    out = slab[:B, :out_dim]
    cls = slab[:B, out_dim:out_dim + n_classes]
    return out, cls


# ----------------------------------------------------------------------------
# Parameter setup (deterministic, synthetic) — plain JAX glue.
# ----------------------------------------------------------------------------
def _spectral_normalize(w, n_iter=30):
    """Divide weight (out, in) by its largest singular value (power iteration)."""
    def _norm(v):
        return v / (jnp.linalg.norm(v) + 1e-12)
    u = _norm(jnp.ones((w.shape[0],), dtype=w.dtype))
    v = jnp.zeros((w.shape[1],), dtype=w.dtype)
    for _ in range(n_iter):
        v = _norm(w.T @ u)
        u = _norm(w @ v)
    sigma = u @ (w @ v)
    return w / sigma


def init_params(key, n_features, min_hidden_size, out_dim, n_classes):
    assert n_classes > 0, "forward returns the classify head; need n_classes > 0"
    h1 = min_hidden_size * 2
    h2 = min_hidden_size
    ks = jax.random.split(key, 8)

    def lin(kw, kb, fan_in, fan_out):
        # PyTorch default Linear init: U(-1/sqrt(fan_in), 1/sqrt(fan_in))
        bound = 1.0 / jnp.sqrt(fan_in)
        w = jax.random.uniform(kw, (fan_out, fan_in), jnp.float32, -bound, bound)
        b = jax.random.uniform(kb, (fan_out,), jnp.float32, -bound, bound)
        return w, b

    w1, b1 = lin(ks[0], ks[1], n_features, h1)
    w2, b2 = lin(ks[2], ks[3], h1, h2)
    wo, bo = lin(ks[4], ks[5], h2, out_dim)
    wc, bc = lin(ks[6], ks[7], h2, n_classes)

    # spectral norm on layer1 / layer2 weights (as in the PyTorch module)
    w1 = _spectral_normalize(w1)
    w2 = _spectral_normalize(w2)

    # padded kernel-layout sizes (lane-aligned)
    Kp = _round_up(n_features, LANE)
    H1p = _round_up(h1, LANE)
    H2p = _round_up(h2, LANE)
    HOp = _round_up(out_dim + n_classes, LANE)

    def pad_wt(w_t, rows, cols):       # (in, out) layout, zero-padded
        return jnp.zeros((rows, cols), jnp.float32).at[
            :w_t.shape[0], :w_t.shape[1]].set(w_t)

    def pad_b(b, cols):
        return jnp.zeros((1, cols), jnp.float32).at[0, :b.shape[0]].set(b)

    # fuse the two heads into one lane-dense matrix
    wh = jnp.concatenate([wo.T, wc.T], axis=1)        # (h2, out_dim+n_classes)
    bh = jnp.concatenate([bo, bc], axis=0)

    return {
        "w1": pad_wt(w1.T, Kp, H1p).astype(jnp.bfloat16),
        "b1": pad_b(b1, H1p),
        "w2": pad_wt(w2.T, H1p, H2p).astype(jnp.bfloat16),
        "b2": pad_b(b2, H2p),
        "wh": pad_wt(wh, H2p, HOp).astype(jnp.bfloat16),
        "bh": pad_b(bh, HOp),
        "out_dim": out_dim,
        "n_classes": n_classes,
    }


# ----------------------------------------------------------------------------
# Pure-JAX reference (mirrors the bf16-in / f32-accum numerics).
# ----------------------------------------------------------------------------
def reference_forward(x, p):
    B, F = x.shape
    Kp = p["w1"].shape[0]
    xp = jnp.zeros((B, Kp), jnp.float32).at[:, :F].set(x)
    xb = xp.astype(jnp.bfloat16).astype(jnp.float32)
    w1 = p["w1"].astype(jnp.float32)
    w2 = p["w2"].astype(jnp.float32)
    wh = p["wh"].astype(jnp.float32)
    h1 = jnp.maximum(xb @ w1 + p["b1"], 0.0)
    h2 = jnp.maximum(h1.astype(jnp.bfloat16).astype(jnp.float32) @ w2 + p["b2"], 0.0)
    logits = h2.astype(jnp.bfloat16).astype(jnp.float32) @ wh + p["bh"]
    od, nc = p["out_dim"], p["n_classes"]
    out = jax.nn.sigmoid(logits[:, :od])
    cls = jax.nn.softmax(logits[:, od:od + nc], axis=1)
    return out, cls


if __name__ == "__main__":
    key = jax.random.PRNGKey(0)

    def run_case(case_key, batch, n_features, min_hidden_size, out_dim,
                 n_classes, tile_m=512, tile_k=None):
        kx, kp = jax.random.split(case_key)
        x = jax.random.normal(kx, (batch, n_features), jnp.float32)
        params = init_params(kp, n_features, min_hidden_size, out_dim, n_classes)
        out, cls = discriminator_ac_forward(x, params, tile_m=tile_m, tile_k=tile_k)
        out, cls = jax.block_until_ready((out, cls))
        ref_out, ref_cls = reference_forward(x, params)
        assert out.shape == (batch, out_dim)
        assert cls.shape == (batch, n_classes)
        assert jnp.allclose(out, ref_out, atol=5e-3, rtol=5e-3)
        assert jnp.allclose(cls, ref_cls, atol=5e-3, rtol=5e-3)
        assert jnp.allclose(jnp.sum(cls, axis=1), 1.0, atol=5e-3)

    k1, k2 = jax.random.split(key)

    # Case 1: module-default small shapes (single batch tile, single K step).
    run_case(k1, batch=8, n_features=32, min_hidden_size=16,
             out_dim=1, n_classes=4)

    # Case 2: exercises the K-reduction grid axis (n_k=3) and multiple
    # batch tiles (n_tiles=3) with a ragged batch size.
    run_case(k2, batch=70, n_features=300, min_hidden_size=32,
             out_dim=1, n_classes=5, tile_m=32, tile_k=128)

    print("KERNEL_OK")
</pallas_src>

<mosaic_0001>
module attributes {stable_mosaic.version = 11 : i64} {
  func.func @_disc_ac_kernel(%arg0: i32, %arg1: i32, %arg2: memref<8x128xbf16, #tpu.memory_space<vmem>>, %arg3: memref<128x128xbf16, #tpu.memory_space<vmem>>, %arg4: memref<1x128xf32, #tpu.memory_space<vmem>>, %arg5: memref<128x128xbf16, #tpu.memory_space<vmem>>, %arg6: memref<1x128xf32, #tpu.memory_space<vmem>>, %arg7: memref<128x128xbf16, #tpu.memory_space<vmem>>, %arg8: memref<1x128xf32, #tpu.memory_space<vmem>>, %arg9: memref<8x128xf32, #tpu.memory_space<vmem>>, %arg10: memref<8x128xf32, #tpu.memory_space<vmem>>) attributes {dimension_semantics = [#tpu.dimension_semantics<parallel>, #tpu.dimension_semantics<arbitrary>], iteration_bounds = array<i64: 1, 1>, scalar_prefetch = 0 : i64, scratch_operands = 1 : i64, tpu.core_type = #tpu.core_type<tc>, window_params = [{transform_indices = @transform_0, window_bounds = array<i64: 8, 128>}, {transform_indices = @transform_1, window_bounds = array<i64: 128, 128>}, {pipeline_mode = #tpu.pipeline_mode<synchronous>, transform_indices = @transform_2, window_bounds = array<i64: 1, 128>}, {pipeline_mode = #tpu.pipeline_mode<synchronous>, transform_indices = @transform_3, window_bounds = array<i64: 128, 128>}, {pipeline_mode = #tpu.pipeline_mode<synchronous>, transform_indices = @transform_4, window_bounds = array<i64: 1, 128>}, {pipeline_mode = #tpu.pipeline_mode<synchronous>, transform_indices = @transform_5, window_bounds = array<i64: 128, 128>}, {pipeline_mode = #tpu.pipeline_mode<synchronous>, transform_indices = @transform_6, window_bounds = array<i64: 1, 128>}, {transform_indices = @transform_7, window_bounds = array<i64: 8, 128>}]} {
    %c0_i32 = arith.constant 0 : i32
    %0 = arith.cmpi eq, %arg1, %c0_i32 : i32
    %1 = arith.extui %0 : i1 to i32
    %c0_i32_0 = arith.constant 0 : i32
    %2 = arith.cmpi ne, %1, %c0_i32_0 : i32
    scf.if %2 {
      %cst_10 = arith.constant 0.000000e+00 : f32
      %12 = vector.broadcast %cst_10 : f32 to vector<8x128xf32>
      %c0_11 = arith.constant 0 : index
      %c0_12 = arith.constant 0 : index
      %13 = vector.load %arg10[%c0_11, %c0_12] : memref<8x128xf32, #tpu.memory_space<vmem>>, vector<8x128xf32>
      tpu.vector_store %arg10[%c0_11, %c0_12], %12 {strides = array<i32>} : memref<8x128xf32, #tpu.memory_space<vmem>>, vector<8x128xf32>,
    } else {
    }
    %c0 = arith.constant 0 : index
    %c0_1 = arith.constant 0 : index
    %3 = vector.load %arg10[%c0, %c0_1] : memref<8x128xf32, #tpu.memory_space<vmem>>, vector<8x128xf32>
    %c0_2 = arith.constant 0 : index
    %c0_3 = arith.constant 0 : index
    %4 = vector.load %arg2[%c0_2, %c0_3] : memref<8x128xbf16, #tpu.memory_space<vmem>>, vector<8x128xbf16>
    %c0_4 = arith.constant 0 : index
    %c0_5 = arith.constant 0 : index
    %5 = vector.load %arg3[%c0_4, %c0_5] : memref<128x128xbf16, #tpu.memory_space<vmem>>, vector<128x128xbf16>
    %cst = arith.constant dense<0.000000e+00> : vector<8x128xf32>
    %6 = tpu.matmul %4, %5, %cst {dimension_numbers = #tpu.dot_dimension_numbers<[1], [0], [0], [1], [0, 0, 1, 1], [], []>} : vector<8x128xbf16>, vector<128x128xbf16>, vector<8x128xf32> -> vector<8x128xf32>
    %7 = arith.addf %3, %6 : vector<8x128xf32>
    %c0_6 = arith.constant 0 : index
    %c0_7 = arith.constant 0 : index
    %8 = vector.load %arg10[%c0_6, %c0_7] : memref<8x128xf32, #tpu.memory_space<vmem>>, vector<8x128xf32>
    tpu.vector_store %arg10[%c0_6, %c0_7], %7 {strides = array<i32>} : memref<8x128xf32, #tpu.memory_space<vmem>>, vector<8x128xf32>,
    %c0_i32_8 = arith.constant 0 : i32
    %9 = arith.cmpi eq, %arg1, %c0_i32_8 : i32
    %10 = arith.extui %9 : i1 to i32
    %c0_i32_9 = arith.constant 0 : i32
    %11 = arith.cmpi ne, %10, %c0_i32_9 : i32
    scf.if %11 {
      %c0_10 = arith.constant 0 : index
      %c0_11 = arith.constant 0 : index
      %12 = vector.load %arg10[%c0_10, %c0_11] : memref<8x128xf32, #tpu.memory_space<vmem>>, vector<8x128xf32>
      %c0_12 = arith.constant 0 : index
      %c0_13 = arith.constant 0 : index
      %13 = vector.load %arg4[%c0_12, %c0_13] : memref<1x128xf32, #tpu.memory_space<vmem>>, vector<1x128xf32>
      %14 = vector.broadcast %13 : vector<1x128xf32> to vector<8x128xf32>
      %15 = arith.addf %12, %14 : vector<8x128xf32>
      %cst_14 = arith.constant 0.000000e+00 : f32
      %16 = vector.broadcast %cst_14 : f32 to vector<8x128xf32>
      %17 = arith.maximumf %15, %16 : vector<8x128xf32>
      %18 = arith.truncf %17 : vector<8x128xf32> to vector<8x128xbf16>
      %c0_15 = arith.constant 0 : index
      %c0_16 = arith.constant 0 : index
      %19 = vector.load %arg5[%c0_15, %c0_16] : memref<128x128xbf16, #tpu.memory_space<vmem>>, vector<128x128xbf16>
      %cst_17 = arith.constant dense<0.000000e+00> : vector<8x128xf32>
      %20 = tpu.matmul %18, %19, %cst_17 {dimension_numbers = #tpu.dot_dimension_numbers<[1], [0], [0], [1], [0, 0, 1, 1], [], []>} : vector<8x128xbf16>, vector<128x128xbf16>, vector<8x128xf32> -> vector<8x128xf32>
      %c0_18 = arith.constant 0 : index
      %c0_19 = arith.constant 0 : index
      %21 = vector.load %arg6[%c0_18, %c0_19] : memref<1x128xf32, #tpu.memory_space<vmem>>, vector<1x128xf32>
      %22 = vector.broadcast %21 : vector<1x128xf32> to vector<8x128xf32>
      %23 = arith.addf %20, %22 : vector<8x128xf32>
      %cst_20 = arith.constant 0.000000e+00 : f32
      %24 = vector.broadcast %cst_20 : f32 to vector<8x128xf32>
      %25 = arith.maximumf %23, %24 : vector<8x128xf32>
      %26 = arith.truncf %25 : vector<8x128xf32> to vector<8x128xbf16>
      %c0_21 = arith.constant 0 : index
      %c0_22 = arith.constant 0 : index
      %27 = vector.load %arg7[%c0_21, %c0_22] : memref<128x128xbf16, #tpu.memory_space<vmem>>, vector<128x128xbf16>
      %cst_23 = arith.constant dense<0.000000e+00> : vector<8x128xf32>
      %28 = tpu.matmul %26, %27, %cst_23 {dimension_numbers = #tpu.dot_dimension_numbers<[1], [0], [0], [1], [0, 0, 1, 1], [], []>} : vector<8x128xbf16>, vector<128x128xbf16>, vector<8x128xf32> -> vector<8x128xf32>
      %c0_24 = arith.constant 0 : index
      %c0_25 = arith.constant 0 : index
      %29 = vector.load %arg8[%c0_24, %c0_25] : memref<1x128xf32, #tpu.memory_space<vmem>>, vector<1x128xf32>
      %30 = vector.broadcast %29 : vector<1x128xf32> to vector<8x128xf32>
      %31 = arith.addf %28, %30 : vector<8x128xf32>
      %32 = tpu.iota {dimensions = array<i32: 1>} : vector<8x128xi32>
      %c1_i32 = arith.constant 1 : i32
      %33 = vector.broadcast %c1_i32 : i32 to vector<8x128xi32>
      %34 = arith.cmpi slt, %32, %33 : vector<8x128xi32>
      %35 = arith.negf %31 : vector<8x128xf32>
      %36 = math.exp %35 : vector<8x128xf32>
      %cst_26 = arith.constant 1.000000e+00 : f32
      %37 = vector.broadcast %cst_26 : f32 to vector<8x128xf32>
      %38 = arith.addf %37, %36 : vector<8x128xf32>
      %39 = arith.divf %37, %38 : vector<8x128xf32>
      %c1_i32_27 = arith.constant 1 : i32
      %40 = vector.broadcast %c1_i32_27 : i32 to vector<8x128xi32>
      %41 = arith.cmpi sge, %32, %40 : vector<8x128xi32>
      %c5_i32 = arith.constant 5 : i32
      %42 = vector.broadcast %c5_i32 : i32 to vector<8x128xi32>
      %43 = arith.cmpi slt, %32, %42 : vector<8x128xi32>
      %44 = arith.andi %41, %43 : vector<8x128xi1>
      %cst_28 = arith.constant 0xFF800000 : f32
      %45 = vector.broadcast %cst_28 : f32 to vector<8x128xf32>
      %46 = arith.select %44, %31, %45 : vector<8x128xi1>, vector<8x128xf32>
      %cst_29 = arith.constant dense<0xFF800000> : vector<8xf32>
      %47 = vector.multi_reduction <maximumf>, %46, %cst_29 [1] : vector<8x128xf32> to vector<8xf32>
      %48 = vector.shape_cast %47 : vector<8xf32> to vector<8x1xf32>
      %49 = vector.broadcast %48 : vector<8x1xf32> to vector<8x128xf32>
      %50 = arith.subf %46, %49 : vector<8x128xf32>
      %51 = math.exp %50 : vector<8x128xf32>
      %cst_30 = arith.constant 0.000000e+00 : f32
      %52 = vector.broadcast %cst_30 : f32 to vector<8x128xf32>
      %53 = arith.select %44, %51, %52 : vector<8x128xi1>, vector<8x128xf32>
      %cst_31 = arith.constant dense<0.000000e+00> : vector<8xf32>
      %54 = vector.multi_reduction <add>, %53, %cst_31 [1] : vector<8x128xf32> to vector<8xf32>
      %55 = vector.shape_cast %54 : vector<8xf32> to vector<8x1xf32>
      %56 = tpu.reciprocal %55 {approx = true} : vector<8x1xf32> -> vector<8x1xf32>
      %57 = vector.broadcast %56 : vector<8x1xf32> to vector<8x128xf32>
      %58 = arith.mulf %53, %57 : vector<8x128xf32>
      %59 = arith.select %34, %39, %58 : vector<8x128xi1>, vector<8x128xf32>
      %c0_32 = arith.constant 0 : index
      %c0_33 = arith.constant 0 : index
      %60 = vector.load %arg9[%c0_32, %c0_33] : memref<8x128xf32, #tpu.memory_space<vmem>>, vector<8x128xf32>
      tpu.vector_store %arg9[%c0_32, %c0_33], %59 {strides = array<i32>} : memref<8x128xf32, #tpu.memory_space<vmem>>, vector<8x128xf32>,
    } else {
    }
    return
  }
  func.func @transform_0(%arg0: i32, %arg1: i32) -> (i32, i32) {
    %c0_i32 = arith.constant 0 : i32
    return %arg0, %arg1 : i32, i32
  }
  func.func @transform_1(%arg0: i32, %arg1: i32) -> (i32, i32) {
    %c0_i32 = arith.constant 0 : i32
    %c0_i32_0 = arith.constant 0 : i32
    return %arg1, %c0_i32 : i32, i32
  }
  func.func @transform_2(%arg0: i32, %arg1: i32) -> (i32, i32) {
    %c0_i32 = arith.constant 0 : i32
    %c0_i32_0 = arith.constant 0 : i32
    %c0_i32_1 = arith.constant 0 : i32
    return %c0_i32, %c0_i32_0 : i32, i32
  }
  func.func @transform_3(%arg0: i32, %arg1: i32) -> (i32, i32) {
    %c0_i32 = arith.constant 0 : i32
    %c0_i32_0 = arith.constant 0 : i32
    %c0_i32_1 = arith.constant 0 : i32
    return %c0_i32, %c0_i32_0 : i32, i32
  }
  func.func @transform_4(%arg0: i32, %arg1: i32) -> (i32, i32) {
    %c0_i32 = arith.constant 0 : i32
    %c0_i32_0 = arith.constant 0 : i32
    %c0_i32_1 = arith.constant 0 : i32
    return %c0_i32, %c0_i32_0 : i32, i32
  }
  func.func @transform_5(%arg0: i32, %arg1: i32) -> (i32, i32) {
    %c0_i32 = arith.constant 0 : i32
    %c0_i32_0 = arith.constant 0 : i32
    %c0_i32_1 = arith.constant 0 : i32
    return %c0_i32, %c0_i32_0 : i32, i32
  }
  func.func @transform_6(%arg0: i32, %arg1: i32) -> (i32, i32) {
    %c0_i32 = arith.constant 0 : i32
    %c0_i32_0 = arith.constant 0 : i32
    %c0_i32_1 = arith.constant 0 : i32
    return %c0_i32, %c0_i32_0 : i32, i32
  }
  func.func @transform_7(%arg0: i32, %arg1: i32) -> (i32, i32) {
    %c0_i32 = arith.constant 0 : i32
    %c0_i32_0 = arith.constant 0 : i32
    return %arg0, %c0_i32 : i32, i32
  }
}

</mosaic_0001>

<llo_original>
// kernel: tpu_custom_call.1
$region0: #{tpu_custom_call.1}
  #allocation0 [shape = 'u32[]', space=smem, size = 0x4, offset = 0x4, fixed_abs, tag = 'smem constant byte address 0x4 - core index']
  #allocation1 [shape = 'u32[72,128]{1,0:T(1,128)}', space=vmem, size = 0x9000, scoped, tag = 'internal scratch']
  #allocation2 [shape = 'f32[8,128]{1,0:T(8,128)}', space=vmem, size = 0x1000, scoped, tag = 'scratch operand']
  %s0 = inlined_call_operand.hbm [shape: bf16[8,128], index: 0, kind: input, shape index: {}]
  %s1 = inlined_call_operand.hbm [shape: bf16[128,128], index: 1, kind: input, shape index: {}]
  %s2 = inlined_call_operand.vmem [shape: f32[1,128], index: 2, kind: input, shape index: {}]
  %s3 = inlined_call_operand.hbm [shape: bf16[128,128], index: 3, kind: input, shape index: {}]
  %s4 = inlined_call_operand.vmem [shape: f32[1,128], index: 4, kind: input, shape index: {}]
  %s5 = inlined_call_operand.hbm [shape: bf16[128,128], index: 5, kind: input, shape index: {}]
  %s6 = inlined_call_operand.vmem [shape: f32[1,128], index: 6, kind: input, shape index: {}]
  %s7 = inlined_call_operand.hbm [shape: f32[8,128], index: 7, kind: output, shape index: {}]
  %s8 = sld [smem:[#allocation0]]
  $region62: #{tpu_custom_call.1} parent=0
    _
  %s10 = ssub.s32 1, %s8
  %s11 = scalar_select 0, %s10, %s8
  $region1: #{tpu_custom_call.1} parent=0
    #allocation3 [shape = 'u8[2048]{0}', space=vmem, size = 0x800, scoped, tag = 'input window, operand 0, single buffered']
    #allocation4 [shape = 's32[1]{0}', space=sflag, size = 0x4, scoped, tag = 'scoped memory for tpu_custom_call.1']
    #allocation5 [shape = 's32[1]{0}', space=sflag, size = 0x4, scoped, tag = 'scoped memory for tpu_custom_call.1']
    #allocation6 [shape = 'u8[32768]{0}', space=vmem, size = 0x8000, scoped, tag = 'input window, operand 1, single buffered']
    #allocation7 [shape = 's32[1]{0}', space=sflag, size = 0x4, scoped, tag = 'scoped memory for tpu_custom_call.1']
    #allocation8 [shape = 'u8[32768]{0}', space=vmem, size = 0x8000, scoped, tag = 'input window, operand 3, single buffered']
    #allocation9 [shape = 'u8[32768]{0}', space=vmem, size = 0x8000, scoped, tag = 'input window, operand 5, single buffered']
    #allocation10 [shape = 's32[1]{0}', space=sflag, size = 0x4, scoped, tag = 'scoped memory for tpu_custom_call.1']
    #allocation11 [shape = 'u8[4096]{0}', space=vmem, size = 0x1000, scoped, tag = 'output window, operand 0, single buffered']
    %12 = vsyncpa [#allocation4], 0
    %13 = vsyncpa [#allocation7], 0
    %14 = vsyncpa [#allocation10], 0
    %15 = vsyncpa [#allocation5], 0
    // Predicated region
    $region2: #{tpu_custom_call.1} parent=1 // pred_check
      _
    $region3: #{tpu_custom_call.1} parent=1 // pred_check_branch
      %17 = sbr.rel (0) target = $region5
    $region4: #{tpu_custom_call.1} parent=1 // pred_region
      %19 = vsyncadd [#allocation4], 0
      %s21 = sshll.u32 %s0, 4
      %s22 = int_to_ptr.hbm [resolvable:$true] %s21
      %s23 = sshll.u32 [#allocation3], 4
      %s24 = int_to_ptr.vmem [resolvable:$true] %s23
      %26 = dma.hbm_to_vmem [thread:$0]  %s22, 64, %s24, [#allocation4]
    $region5: #{tpu_custom_call.1} parent=1 // pred_fallthru
      _
    // Predicated region
    $region6: #{tpu_custom_call.1} parent=1 // pred_check
      _
    $region7: #{tpu_custom_call.1} parent=1 // pred_check_branch
      %28 = sbr.rel (0) target = $region9
    $region8: #{tpu_custom_call.1} parent=1 // pred_region
      %30 = vsyncadd [#allocation7], 0
      %s31 = sshll.u32 %s1, 4
      %s32 = int_to_ptr.hbm [resolvable:$true] %s31
      %s33 = sshll.u32 [#allocation6], 4
      %s34 = int_to_ptr.vmem [resolvable:$true] %s33
      %39 = dma.hbm_to_vmem [thread:$0]  %s32, 1024, %s34, [#allocation7], 64, 64, 4
    $region9: #{tpu_custom_call.1} parent=1 // pred_fallthru
      _
    // Predicated region
    $region10: #{tpu_custom_call.1} parent=1 // pred_check
      _
    $region11: #{tpu_custom_call.1} parent=1 // pred_check_branch
      %41 = sbr.rel (0) target = $region13
    $region12: #{tpu_custom_call.1} parent=1 // pred_region
      _
    $region13: #{tpu_custom_call.1} parent=1 // pred_fallthru
      _
    // Predicated region
    $region14: #{tpu_custom_call.1} parent=1 // pred_check
      _
    $region15: #{tpu_custom_call.1} parent=1 // pred_check_branch
      %43 = sbr.rel (0) target = $region17
    $region16: #{tpu_custom_call.1} parent=1 // pred_region
      %45 = vsyncadd [#allocation7], 0
      %s46 = sshll.u32 %s3, 4
      %s47 = int_to_ptr.hbm [resolvable:$true] %s46
      %s48 = sshll.u32 [#allocation8], 4
      %s49 = int_to_ptr.vmem [resolvable:$true] %s48
      %54 = dma.hbm_to_vmem [thread:$0]  %s47, 1024, %s49, [#allocation7], 64, 64, 4
    $region17: #{tpu_custom_call.1} parent=1 // pred_fallthru
      _
    // Predicated region
    $region18: #{tpu_custom_call.1} parent=1 // pred_check
      _
    $region19: #{tpu_custom_call.1} parent=1 // pred_check_branch
      %56 = sbr.rel (0) target = $region21
    $region20: #{tpu_custom_call.1} parent=1 // pred_region
      _
    $region21: #{tpu_custom_call.1} parent=1 // pred_fallthru
      _
    // Predicated region
    $region22: #{tpu_custom_call.1} parent=1 // pred_check
      _
    $region23: #{tpu_custom_call.1} parent=1 // pred_check_branch
      %58 = sbr.rel (0) target = $region25
    $region24: #{tpu_custom_call.1} parent=1 // pred_region
      %60 = vsyncadd [#allocation10], 0
      %s61 = sshll.u32 %s5, 4
      %s62 = int_to_ptr.hbm [resolvable:$true] %s61
      %s63 = sshll.u32 [#allocation9], 4
      %s64 = int_to_ptr.vmem [resolvable:$true] %s63
      %69 = dma.hbm_to_vmem [thread:$0]  %s62, 1024, %s64, [#allocation10], 64, 64, 4
    $region25: #{tpu_custom_call.1} parent=1 // pred_fallthru
      _
    // Predicated region
    $region26: #{tpu_custom_call.1} parent=1 // pred_check
      _
    $region27: #{tpu_custom_call.1} parent=1 // pred_check_branch
      %71 = sbr.rel (0) target = $region29
    $region28: #{tpu_custom_call.1} parent=1 // pred_region
      _
    $region29: #{tpu_custom_call.1} parent=1 // pred_fallthru
      _
    // Predicated region
    $region30: #{tpu_custom_call.1} parent=1 // pred_check
      _
    $region31: #{tpu_custom_call.1} parent=1 // pred_check_branch
      %73 = sbr.rel (0) target = $region33
    $region32: #{tpu_custom_call.1} parent=1 // pred_region
      %75 = dma.done [#allocation4], 64
    $region33: #{tpu_custom_call.1} parent=1 // pred_fallthru
      _
    // Predicated region
    $region34: #{tpu_custom_call.1} parent=1 // pred_check
      _
    $region35: #{tpu_custom_call.1} parent=1 // pred_check_branch
      %77 = sbr.rel (0) target = $region37
    $region36: #{tpu_custom_call.1} parent=1 // pred_region
      %79 = dma.done [#allocation7], 1024
    $region37: #{tpu_custom_call.1} parent=1 // pred_fallthru
      _
    // Predicated region
    $region38: #{tpu_custom_call.1} parent=1 // pred_check
      _
    $region39: #{tpu_custom_call.1} parent=1 // pred_check_branch
      %81 = sbr.rel (0) target = $region41
    $region40: #{tpu_custom_call.1} parent=1 // pred_region
      %83 = dma.done [#allocation7], 1024
    $region41: #{tpu_custom_call.1} parent=1 // pred_fallthru
      _
    // Predicated region
    $region42: #{tpu_custom_call.1} parent=1 // pred_check
      _
    $region43: #{tpu_custom_call.1} parent=1 // pred_check_branch
      %85 = sbr.rel (0) target = $region45
    $region44: #{tpu_custom_call.1} parent=1 // pred_region
      %87 = dma.done [#allocation10], 1024
    $region45: #{tpu_custom_call.1} parent=1 // pred_fallthru
      _
    %p88 = scmp.eq.s32.totalorder 0, 0
    // Predicated region
    $region46: #{tpu_custom_call.1} parent=1 // pred_check
      %p89 = pneg %p88
    $region47: #{tpu_custom_call.1} parent=1 // pred_check_branch
      %91 = sbr.rel (%p89) target = $region49
    $region48: #{tpu_custom_call.1} parent=1 // pred_region
      %92 = vst [vmem:[#allocation2] sm:$0xff] 0.0
    $region49: #{tpu_custom_call.1} parent=1 // pred_fallthru
      _
    %v93 = vld [vmem:[#allocation2] sm:$0xff]
    %v94 = vld [vmem:[#allocation3] sm:$0xf]
    %v95 = vld [vmem:[#allocation6] sm:$0xf]
    %v96 = vld [vmem:[#allocation6 + $0x4] sm:$0xf]
    %v97 = vld [vmem:[#allocation6 + $0x8] sm:$0xf]
    %v98 = vld [vmem:[#allocation6 + $0xc] sm:$0xf]
    %v99 = vld [vmem:[#allocation6 + $0x10] sm:$0xf]
    %v100 = vld [vmem:[#allocation6 + $0x14] sm:$0xf]
    %v101 = vld [vmem:[#allocation6 + $0x18] sm:$0xf]
    %v102 = vld [vmem:[#allocation6 + $0x1c] sm:$0xf]
    %v103 = vld [vmem:[#allocation6 + $0x20] sm:$0xf]
    %v104 = vld [vmem:[#allocation6 + $0x24] sm:$0xf]
    %v105 = vld [vmem:[#allocation6 + $0x28] sm:$0xf]
    %v106 = vld [vmem:[#allocation6 + $0x2c] sm:$0xf]
    %v107 = vld [vmem:[#allocation6 + $0x30] sm:$0xf]
    %v108 = vld [vmem:[#allocation6 + $0x34] sm:$0xf]
    %v109 = vld [vmem:[#allocation6 + $0x38] sm:$0xf]
    %v110 = vld [vmem:[#allocation6 + $0x3c] sm:$0xf]
    %v127 = vunpack.c.l.b16 %v95
    %v128 = vunpack.c.l.b16 %v96
    %v129 = vunpack.c.l.b16 %v97
    %v130 = vunpack.c.l.b16 %v98
    %v131 = vunpack.c.l.b16 %v99
    %v132 = vunpack.c.l.b16 %v100
    %v133 = vunpack.c.l.b16 %v101
    %v134 = vunpack.c.l.b16 %v102
    %v135 = vunpack.c.l.b16 %v103
    %v136 = vunpack.c.l.b16 %v104
    %v137 = vunpack.c.l.b16 %v105
    %v138 = vunpack.c.l.b16 %v106
    %v139 = vunpack.c.l.b16 %v107
    %v140 = vunpack.c.l.b16 %v108
    %v141 = vunpack.c.l.b16 %v109
    %v142 = vunpack.c.l.b16 %v110
    %v143 = vpack.c.b16 %v128, %v127
    %v144 = vpack.c.b16 %v130, %v129
    %v145 = vpack.c.b16 %v132, %v131
    %v146 = vpack.c.b16 %v134, %v133
    %v147 = vpack.c.b16 %v136, %v135
    %v148 = vpack.c.b16 %v138, %v137
    %v149 = vpack.c.b16 %v140, %v139
    %v150 = vpack.c.b16 %v142, %v141
    %159 = vmatpush.bf16.msra.mxu0 %v150
    %160 = vmatpush.bf16.msra.mxu0 %v149
    %161 = vmatpush.bf16.msra.mxu0 %v148
    %162 = vmatpush.bf16.msra.mxu0 %v147
    %163 = vmatpush.bf16.msra.mxu0 %v146
    %164 = vmatpush.bf16.msra.mxu0 %v145
    %165 = vmatpush.bf16.msra.mxu0 %v144
    %166 = vmatpush.bf16.msra.mxu0 %v143
    %167 = vmatmul.bf16.gmra.mxu0 %v94
    %v168 = vpop.f32.mrf.mxu0
    %v169 = vadd.f32 0.0, %v168
    %v170 = vpop.f32.mrf.mxu0
    %171 = vdwg.mxu0
    %v172 = vadd.f32 %v93, %v169
    %173 = vst [vmem:[#allocation2] sm:$0xff] %v172
    // Predicated region
    $region50: #{tpu_custom_call.1} parent=1 // pred_check
      %p174 = pneg %p88
    $region51: #{tpu_custom_call.1} parent=1 // pred_check_branch
      %176 = sbr.rel (%p174) target = $region53
    $region52: #{tpu_custom_call.1} parent=1 // pred_region
      %v177 = vld [vmem:[#allocation2] sm:$0xff]
      %v178 = vld [vmem:[%s2] sm:$0x1]
      %v180 = vperm.slane %v178, 0
      %v182 = vadd.f32 %v177, %v180
      %v183 = vmax.f32 %v182, 0.0
      %v184 = vpack.c.bf16 %v183, %v183
      %v185 = vld [vmem:[#allocation8] sm:$0xf]
      %v186 = vld [vmem:[#allocation8 + $0x4] sm:$0xf]
      %v187 = vld [vmem:[#allocation8 + $0x8] sm:$0xf]
      %v188 = vld [vmem:[#allocation8 + $0xc] sm:$0xf]
      %v189 = vld [vmem:[#allocation8 + $0x10] sm:$0xf]
      %v190 = vld [vmem:[#allocation8 + $0x14] sm:$0xf]
      %v191 = vld [vmem:[#allocation8 + $0x18] sm:$0xf]
      %v192 = vld [vmem:[#allocation8 + $0x1c] sm:$0xf]
      %v193 = vld [vmem:[#allocation8 + $0x20] sm:$0xf]
      %v194 = vld [vmem:[#allocation8 + $0x24] sm:$0xf]
      %v195 = vld [vmem:[#allocation8 + $0x28] sm:$0xf]
      %v196 = vld [vmem:[#allocation8 + $0x2c] sm:$0xf]
      %v197 = vld [vmem:[#allocation8 + $0x30] sm:$0xf]
      %v198 = vld [vmem:[#allocation8 + $0x34] sm:$0xf]
      %v199 = vld [vmem:[#allocation8 + $0x38] sm:$0xf]
      %v200 = vld [vmem:[#allocation8 + $0x3c] sm:$0xf]
      %v201 = vld [vmem:[%s4] sm:$0x1]
      %v203 = vperm.slane %v201, 0
      %v221 = vunpack.c.l.b16 %v185
      %v222 = vunpack.c.l.b16 %v186
      %v223 = vunpack.c.l.b16 %v187
      %v224 = vunpack.c.l.b16 %v188
      %v225 = vunpack.c.l.b16 %v189
      %v226 = vunpack.c.l.b16 %v190
      %v227 = vunpack.c.l.b16 %v191
      %v228 = vunpack.c.l.b16 %v192
      %v229 = vunpack.c.l.b16 %v193
      %v230 = vunpack.c.l.b16 %v194
      %v231 = vunpack.c.l.b16 %v195
      %v232 = vunpack.c.l.b16 %v196
      %v233 = vunpack.c.l.b16 %v197
      %v234 = vunpack.c.l.b16 %v198
      %v235 = vunpack.c.l.b16 %v199
      %v236 = vunpack.c.l.b16 %v200
      %v237 = vpack.c.b16 %v222, %v221
      %v238 = vpack.c.b16 %v224, %v223
      %v239 = vpack.c.b16 %v226, %v225
      %v240 = vpack.c.b16 %v228, %v227
      %v241 = vpack.c.b16 %v230, %v229
      %v242 = vpack.c.b16 %v232, %v231
      %v243 = vpack.c.b16 %v234, %v233
      %v244 = vpack.c.b16 %v236, %v235
      %253 = vmatpush.bf16.msra.mxu0 %v244
      %254 = vmatpush.bf16.msra.mxu0 %v243
      %255 = vmatpush.bf16.msra.mxu0 %v242
      %256 = vmatpush.bf16.msra.mxu0 %v241
      %257 = vmatpush.bf16.msra.mxu0 %v240
      %258 = vmatpush.bf16.msra.mxu0 %v239
      %259 = vmatpush.bf16.msra.mxu0 %v238
      %260 = vmatpush.bf16.msra.mxu0 %v237
      %261 = vmatmul.bf16.gmra.mxu0 %v184
      %v262 = vpop.f32.mrf.mxu0
      %v263 = vadd.f32 %v203, %v262
      %v264 = vpop.f32.mrf.mxu0
      %265 = vdwg.mxu0
      %v266 = vmax.f32 %v263, 0.0
      %v267 = vpack.c.bf16 %v266, %v266
      %v268 = vld [vmem:[#allocation9] sm:$0xf]
      %v269 = vld [vmem:[#allocation9 + $0x4] sm:$0xf]
      %v270 = vld [vmem:[#allocation9 + $0x8] sm:$0xf]
      %v271 = vld [vmem:[#allocation9 + $0xc] sm:$0xf]
      %v272 = vld [vmem:[#allocation9 + $0x10] sm:$0xf]
      %v273 = vld [vmem:[#allocation9 + $0x14] sm:$0xf]
      %v274 = vld [vmem:[#allocation9 + $0x18] sm:$0xf]
      %v275 = vld [vmem:[#allocation9 + $0x1c] sm:$0xf]
      %v276 = vld [vmem:[#allocation9 + $0x20] sm:$0xf]
      %v277 = vld [vmem:[#allocation9 + $0x24] sm:$0xf]
      %v278 = vld [vmem:[#allocation9 + $0x28] sm:$0xf]
      %v279 = vld [vmem:[#allocation9 + $0x2c] sm:$0xf]
      %v280 = vld [vmem:[#allocation9 + $0x30] sm:$0xf]
      %v281 = vld [vmem:[#allocation9 + $0x34] sm:$0xf]
      %v282 = vld [vmem:[#allocation9 + $0x38] sm:$0xf]
      %v283 = vld [vmem:[#allocation9 + $0x3c] sm:$0xf]
      %v284 = vld [vmem:[%s6] sm:$0x1]
      %v286 = vperm.slane %v284, 0
      %v304 = vunpack.c.l.b16 %v268
      %v305 = vunpack.c.l.b16 %v269
      %v306 = vunpack.c.l.b16 %v270
      %v307 = vunpack.c.l.b16 %v271
      %v308 = vunpack.c.l.b16 %v272
      %v309 = vunpack.c.l.b16 %v273
      %v310 = vunpack.c.l.b16 %v274
      %v311 = vunpack.c.l.b16 %v275
      %v312 = vunpack.c.l.b16 %v276
      %v313 = vunpack.c.l.b16 %v277
      %v314 = vunpack.c.l.b16 %v278
      %v315 = vunpack.c.l.b16 %v279
      %v316 = vunpack.c.l.b16 %v280
      %v317 = vunpack.c.l.b16 %v281
      %v318 = vunpack.c.l.b16 %v282
      %v319 = vunpack.c.l.b16 %v283
      %v320 = vpack.c.b16 %v305, %v304
      %v321 = vpack.c.b16 %v307, %v306
      %v322 = vpack.c.b16 %v309, %v308
      %v323 = vpack.c.b16 %v311, %v310
      %v324 = vpack.c.b16 %v313, %v312
      %v325 = vpack.c.b16 %v315, %v314
      %v326 = vpack.c.b16 %v317, %v316
      %v327 = vpack.c.b16 %v319, %v318
      %336 = vmatpush.bf16.msra.mxu0 %v327
      %337 = vmatpush.bf16.msra.mxu0 %v326
      %338 = vmatpush.bf16.msra.mxu0 %v325
      %339 = vmatpush.bf16.msra.mxu0 %v324
      %340 = vmatpush.bf16.msra.mxu0 %v323
      %341 = vmatpush.bf16.msra.mxu0 %v322
      %342 = vmatpush.bf16.msra.mxu0 %v321
      %343 = vmatpush.bf16.msra.mxu0 %v320
      %344 = vmatmul.bf16.gmra.mxu0 %v267
      %v345 = vpop.f32.mrf.mxu0
      %v346 = vadd.f32 %v286, %v345
      %v347 = vpop.f32.mrf.mxu0
      %348 = vdwg.mxu0
      %v349 = vlaneseq
      %v350 = vand.u32 %v349, 127
      %vm351 = vcmp.lt.s32.totalorder %v350, 1
      %v352 = vxor.u32 %v346, 2147483648
      %v353 = vmul.f32 %v352, 1.442695
      %v354 = vpow.pop %v353
      %v355 = vadd.f32 %v354, 1.0
      %v356 = vrcp.pop %v355
      %v357 = vmul.f32 %v355, %v356
      %v358 = vsub.f32 1.0, %v357
      %v359 = vmul.f32 %v356, %v358
      %v360 = vadd.f32 %v356, %v359
      %vm361 = vweird.f32 %v355
      %vm362 = vweird.f32 %v356
      %vm363 = vmor %vm361, %vm362
      %v364 = vsel %vm363, %v356, %v360
      %v365 = vand.u32 2147483647, %v355
      %vm366 = vcmp.eq.f32.partialorder %v365, 8.507059e+37
      %v367 = vand.u32 %v355, 2147483648
      %v368 = vor.u32 1.1754944e-38, %v367
      %v369 = vsel %vm366, %v368, %v364
      %v370 = vmul.f32 1.0, %v369
      %vm371 = vcmp.ge.s32.totalorder %v350, 1
      %vm372 = vcmp.lt.s32.totalorder %v350, 5
      %vm373 = vmand %vm371, %vm372
      %v374 = vsel %vm373, %v346, -inf
      %375 = vmax.xlane.f32.xlu0 %v374
      %v376 = vpop.xlane.xlu0 %375
      %v377 = vsub.f32 %v374, %v376
      %v378 = vmul.f32 %v377, 1.442695
      %v379 = vpow.pop %v378
      %v380 = vsel %vm373, %v379, 0.0
      %381 = vadd.xlane.f32.xlu0 %v380
      %v382 = vpop.xlane.xlu0 %381
      %v383 = vrcp.pop %v382
      %v384 = vmul.f32 %v380, %v383
      %v385 = vsel %vm351, %v370, %v384
      %386 = vst [vmem:[#allocation11] sm:$0xff] %v385
    $region53: #{tpu_custom_call.1} parent=1 // pred_fallthru
      _
    // Predicated region
    $region54: #{tpu_custom_call.1} parent=1 // pred_check
      _
    $region55: #{tpu_custom_call.1} parent=1 // pred_check_branch
      %388 = sbr.rel (0) target = $region57
    $region56: #{tpu_custom_call.1} parent=1 // pred_region
      %390 = vsyncadd [#allocation5], 0
      %s392 = sshll.u32 [#allocation11], 4
      %s393 = int_to_ptr.vmem [resolvable:$true] %s392
      %s394 = sshll.u32 %s7, 4
      %s395 = int_to_ptr.hbm [resolvable:$true] %s394
      %397 = dma.vmem_to_hbm [thread:$0]  %s393, 128, %s395, [#allocation5]
    $region57: #{tpu_custom_call.1} parent=1 // pred_fallthru
      _
    // Predicated region
    $region58: #{tpu_custom_call.1} parent=1 // pred_check
      _
    $region59: #{tpu_custom_call.1} parent=1 // pred_check_branch
      %399 = sbr.rel (0) target = $region61
    $region60: #{tpu_custom_call.1} parent=1 // pred_region
      %401 = dma.done [#allocation5], 128
    $region61: #{tpu_custom_call.1} parent=1 // pred_fallthru
      _
    %402 = vsyncpa [#allocation4], 1
    %403 = vsyncpa [#allocation7], 1
    %404 = vsyncpa [#allocation10], 1
    %405 = vsyncpa [#allocation5], 1

</llo_original>
